<compile_context>
chip_gen: v7x
topology: tpu7x:2x2x1
jax: 0.10.0
libtpu: 0.0.40
codegen_flags: <defaults>
</compile_context>

<pallas_src>
import functools
import math

import numpy as np

import jax
import jax.numpy as jnp
from jax.experimental import pallas as pl
from jax.experimental.pallas import tpu as pltpu


_TILE_BUDGET_BYTES = 1 << 20  # ~1 MiB/tile: 85% HBM-roofline plateau, fits every gen.


def _shift_kernel(x_ref, t_ref, c_ref, o_ref, *, fold, T, chans_per_block,
                  blocks_per_item):
    """One (R, F) row tile of the flattened (B*C*T, F) view.

    t_ref[r]: time index of row r within its channel      (compile-time pattern)
    c_ref[r]: channel index of row r within this block    (compile-time pattern)
    """
    x = x_ref[...]                       # (R, F)
    F = x.shape[1]

    if fold == 0:
        # Degenerate fold (C < shift_div): every channel is identity.
        o_ref[...] = x
        return

    # Absolute channel of each row = per-block pattern + scalar base offset.
    c_base = (pl.program_id(0) % blocks_per_item) * chans_per_block
    c = c_ref[...] + c_base              # (R, 1) int32
    t = t_ref[...]                       # (R, 1) int32

    zero = jnp.zeros((), x.dtype)
    if T > 1:
        zrow = jnp.zeros((1, F), x.dtype)
        up = jnp.concatenate([x[1:, :], zrow], axis=0)     # up[r]   = x[r + 1]
        down = jnp.concatenate([zrow, x[:-1, :]], axis=0)  # down[r] = x[r - 1]
    else:
        up = jnp.zeros_like(x)
        down = jnp.zeros_like(x)

    # Rows that would read across a channel (or block/batch) boundary are exactly
    # the t == T-1 / t == 0 rows, which the PyTorch module zeroes anyway.
    left_val = jnp.where(t == T - 1, zero, up)    # shift left in time
    right_val = jnp.where(t == 0, zero, down)     # shift right in time

    out = jnp.where(c < fold, left_val,
                    jnp.where(c < 2 * fold, right_val, x))
    o_ref[...] = out                              # single unmasked full-tile store


def _pick_chans_per_block(k_max, T, bytes_per_row, budget=_TILE_BUDGET_BYTES):
    """Largest k | k_max such that a (k*T, F) tile is (8,·)-layout legal and
    within the VMEM tile budget.  Returns None if no legal k exists."""
    best = None
    for k in range(1, k_max + 1):
        if k_max % k:
            continue
        rows = k * T
        if rows % 8:                       # second-to-last block dim rule
            continue
        if rows * bytes_per_row <= budget:
            best = k
    return best


def _row_patterns(rows_per_block, T, C):
    rows = np.arange(rows_per_block, dtype=np.int32)
    t_pat = jnp.asarray((rows % T).reshape(rows_per_block, 1))
    c_pat = jnp.asarray(((rows // T) % C).reshape(rows_per_block, 1))
    return t_pat, c_pat


def temporal_shift(x, shift_div=8):
    """TemporalShift forward. x: (B, C, T, F) -> (B, C, T, F)."""
    B, C, T, F = x.shape
    fold = C // shift_div
    if fold == 0:
        return x                                   # pure identity

    dtype = x.dtype
    itemsize = dtype.itemsize

    # Lane-dense guard: pad F to a multiple of 128 so stores are unmasked vst.
    F_pad = F
    if F % 128:
        F_pad = -(-F // 128) * 128
        x = jnp.pad(x, ((0, 0), (0, 0), (0, 0), (0, F_pad - F)))

    bytes_per_row = F_pad * itemsize
    total_rows = B * C * T

    k = _pick_chans_per_block(C, T, bytes_per_row)
    if k is None:
        # No channel-aligned layout-legal tiling (odd T with awkward C): fall back
        # to a single block spanning the whole array (full dims are always legal).
        rows_per_block = total_rows
        chans_per_block = C
        blocks_per_item = 1
    else:
        rows_per_block = k * T
        chans_per_block = k
        blocks_per_item = C // k

    n_blocks = total_rows // rows_per_block
    t_pat, c_pat = _row_patterns(rows_per_block, T, C)

    kernel = functools.partial(_shift_kernel, fold=fold, T=T,
                               chans_per_block=chans_per_block,
                               blocks_per_item=blocks_per_item)

    # Only raise the scoped-VMEM limit if the (rare) fallback tile needs it;
    # the normal 1 MiB tiles fit every generation's default (v5e 16 MiB,
    # v6e/v7x 32 MiB) with in+out double-buffering plus temporaries.
    tile_bytes = rows_per_block * bytes_per_row
    est_vmem = 8 * tile_bytes + (1 << 20)
    vmem_limit = int(min(est_vmem, 64 << 20)) if est_vmem > (14 << 20) else None

    xf = x.reshape(total_rows, F_pad)              # free row-major collapse
    out = pl.pallas_call(
        kernel,
        out_shape=jax.ShapeDtypeStruct((total_rows, F_pad), dtype),
        grid=(n_blocks,),
        in_specs=[
            pl.BlockSpec((rows_per_block, F_pad), lambda i: (i, 0)),
            pl.BlockSpec((rows_per_block, 1), lambda i: (0, 0)),
            pl.BlockSpec((rows_per_block, 1), lambda i: (0, 0)),
        ],
        out_specs=pl.BlockSpec((rows_per_block, F_pad), lambda i: (i, 0)),
        compiler_params=pltpu.CompilerParams(
            dimension_semantics=("parallel",),
            vmem_limit_bytes=vmem_limit),
        cost_estimate=pl.CostEstimate(
            flops=0, transcendentals=0,
            bytes_accessed=int(2 * total_rows * F_pad * itemsize)),
    )(xf, t_pat, c_pat)

    out = out.reshape(B, C, T, F_pad)
    if F_pad != F:
        out = out[..., :F]
    return out


def temporal_shift_inplace(x, shift_div=8):
    """Donation-friendly variant: the output aliases the input buffer and the
    grid only touches the 2*fold shifted channels, so identity channels (75% of
    the traffic at shift_div=8) never leave HBM.  Call under jit (optionally
    with donate_argnums) for true in-place behaviour; without donation XLA adds
    one defensive copy but results are identical.
    TODO(synk): F % 128 != 0 runs as-is (masked partial stores); padding here
    would reintroduce the traffic this variant exists to avoid."""
    B, C, T, F = x.shape
    fold = C // shift_div
    if fold == 0:
        return x

    itemsize = x.dtype.itemsize
    bytes_per_row = F * itemsize
    k = _pick_chans_per_block(math.gcd(2 * fold, C), T, bytes_per_row)
    if k is None:
        return temporal_shift(x, shift_div)        # no legal aligned tiling

    rows_per_block = k * T
    blocks_per_item_full = (C * T) // rows_per_block   # row-blocks per batch item
    nsb = (2 * fold * T) // rows_per_block             # shifted row-blocks per item
    total_rows = B * C * T

    t_pat, c_pat = _row_patterns(rows_per_block, T, C)
    kernel = functools.partial(_shift_kernel, fold=fold, T=T,
                               chans_per_block=k, blocks_per_item=nsb)

    def row_block_map(i):
        return ((i // nsb) * blocks_per_item_full + (i % nsb), 0)

    xf = x.reshape(total_rows, F)
    out = pl.pallas_call(
        kernel,
        out_shape=jax.ShapeDtypeStruct((total_rows, F), x.dtype),
        grid=(B * nsb,),
        in_specs=[
            pl.BlockSpec((rows_per_block, F), row_block_map),
            pl.BlockSpec((rows_per_block, 1), lambda i: (0, 0)),
            pl.BlockSpec((rows_per_block, 1), lambda i: (0, 0)),
        ],
        out_specs=pl.BlockSpec((rows_per_block, F), row_block_map),
        input_output_aliases={0: 0},
        compiler_params=pltpu.CompilerParams(
            dimension_semantics=("parallel",)),
        cost_estimate=pl.CostEstimate(
            flops=0, transcendentals=0,
            bytes_accessed=int(2 * B * 2 * fold * T * F * itemsize)),
    )(xf, t_pat, c_pat)
    return out.reshape(B, C, T, F)


def temporal_shift_ref(x, shift_div=8):
    """Pure-JAX reference mirroring the PyTorch module exactly."""
    B, C, T, F = x.shape
    fold = C // shift_div
    t = jnp.transpose(x, (0, 2, 1, 3))  # (B, T, C, F)
    out = jnp.zeros_like(t)
    out = out.at[:, :-1, :fold, :].set(t[:, 1:, :fold, :])
    out = out.at[:, 1:, fold:2 * fold, :].set(t[:, :-1, fold:2 * fold, :])
    out = out.at[:, :, 2 * fold:, :].set(t[:, :, 2 * fold:, :])
    return jnp.transpose(out, (0, 2, 1, 3))  # (B, C, T, F)


if __name__ == "__main__":
    k0, k1, k2 = jax.random.split(jax.random.PRNGKey(0), 3)

    # Primary case: B=2, C=16, T=8, F=128, shift_div=8 -> fold=2.
    x = jax.random.normal(k0, (2, 16, 8, 128), dtype=jnp.float32)
    out = jax.block_until_ready(temporal_shift(x, shift_div=8))
    ref = temporal_shift_ref(x, shift_div=8)
    assert out.shape == ref.shape and out.dtype == ref.dtype
    assert jnp.array_equal(out, ref), "mismatch vs reference (main case)"

    # Donated / aliased variant (only shifted channels move through the kernel).
    out_ip = jax.block_until_ready(
        jax.jit(functools.partial(temporal_shift_inplace, shift_div=8))(x))
    assert jnp.array_equal(out_ip, ref), "mismatch vs reference (in-place case)"

    # Ragged shape: C not a multiple of shift_div, T not a multiple of 8, and
    # F=96 (exercises the lane-padding path).
    x2 = jax.random.normal(k1, (2, 12, 6, 96), dtype=jnp.float32)
    out2 = jax.block_until_ready(temporal_shift(x2, shift_div=8))
    assert jnp.array_equal(out2, temporal_shift_ref(x2, shift_div=8)), \
        "mismatch vs reference (ragged case)"

    # Degenerate case: C < shift_div -> fold = 0 (pure identity).
    x3 = jax.random.normal(k2, (2, 4, 8, 128), dtype=jnp.float32)
    out3 = jax.block_until_ready(temporal_shift(x3, shift_div=8))
    assert jnp.array_equal(out3, temporal_shift_ref(x3, shift_div=8)), \
        "mismatch vs reference (fold=0 case)"

    print("KERNEL_OK")
</pallas_src>

<mosaic_0001>
module attributes {stable_mosaic.version = 11 : i64} {
  func.func @_shift_kernel(%arg0: i32, %arg1: memref<128x128xf32, #tpu.memory_space<vmem>>, %arg2: memref<128x1xi32, #tpu.memory_space<vmem>>, %arg3: memref<128x1xi32, #tpu.memory_space<vmem>>, %arg4: memref<128x128xf32, #tpu.memory_space<vmem>>) attributes {dimension_semantics = [#tpu.dimension_semantics<parallel>], iteration_bounds = array<i64: 2>, scalar_prefetch = 0 : i64, scratch_operands = 0 : i64, tpu.core_type = #tpu.core_type<tc>, window_params = [{transform_indices = @transform_0, window_bounds = array<i64: 128, 128>}, {pipeline_mode = #tpu.pipeline_mode<synchronous>, transform_indices = @transform_1, window_bounds = array<i64: 128, 1>}, {pipeline_mode = #tpu.pipeline_mode<synchronous>, transform_indices = @transform_2, window_bounds = array<i64: 128, 1>}, {transform_indices = @transform_3, window_bounds = array<i64: 128, 128>}]} {
    %c0 = arith.constant 0 : index
    %c0_0 = arith.constant 0 : index
    %0 = vector.load %arg1[%c0, %c0_0] : memref<128x128xf32, #tpu.memory_space<vmem>>, vector<128x128xf32>
    %c1_i32 = arith.constant 1 : i32
    %c0_i32 = arith.constant 0 : i32
    %1 = arith.cmpi eq, %c1_i32, %c0_i32 : i32
    %c1_i32_1 = arith.constant 1 : i32
    %2 = arith.select %1, %c1_i32_1, %c1_i32 : i32
    %3 = arith.remsi %arg0, %2 : i32
    %c0_i32_2 = arith.constant 0 : i32
    %4 = arith.cmpi ne, %3, %c0_i32_2 : i32
    %c0_i32_3 = arith.constant 0 : i32
    %5 = arith.cmpi slt, %3, %c0_i32_3 : i32
    %c0_i32_4 = arith.constant 0 : i32
    %6 = arith.cmpi slt, %2, %c0_i32_4 : i32
    %7 = arith.xori %5, %6 : i1
    %8 = arith.andi %7, %4 : i1
    %9 = arith.addi %3, %2 : i32
    %10 = arith.select %8, %9, %3 : i32
    %c16_i32 = arith.constant 16 : i32
    %11 = arith.muli %10, %c16_i32 : i32
    %c0_5 = arith.constant 0 : index
    %c0_6 = arith.constant 0 : index
    %12 = vector.load %arg3[%c0_5, %c0_6] : memref<128x1xi32, #tpu.memory_space<vmem>>, vector<128x1xi32>
    %13 = vector.broadcast %11 : i32 to vector<128x1xi32>
    %14 = arith.addi %12, %13 : vector<128x1xi32>
    %c0_7 = arith.constant 0 : index
    %c0_8 = arith.constant 0 : index
    %15 = vector.load %arg2[%c0_7, %c0_8] : memref<128x1xi32, #tpu.memory_space<vmem>>, vector<128x1xi32>
    %cst = arith.constant 0.000000e+00 : f32
    %16 = vector.broadcast %cst : f32 to vector<1x128xf32>
    %17 = vector.extract_strided_slice %0 {offsets = [1, 0], sizes = [127, 128], strides = [1, 1]} : vector<128x128xf32> to vector<127x128xf32>
    %18 = tpu.concatenate %17, %16 in 0 : vector<127x128xf32>, vector<1x128xf32> -> vector<128x128xf32>
    %19 = vector.extract_strided_slice %0 {offsets = [0, 0], sizes = [127, 128], strides = [1, 1]} : vector<128x128xf32> to vector<127x128xf32>
    %20 = tpu.concatenate %16, %19 in 0 : vector<1x128xf32>, vector<127x128xf32> -> vector<128x128xf32>
    %c7_i32 = arith.constant 7 : i32
    %21 = vector.broadcast %c7_i32 : i32 to vector<128x1xi32>
    %22 = arith.cmpi eq, %15, %21 : vector<128x1xi32>
    %cst_9 = arith.constant 0.000000e+00 : f32
    %23 = vector.shape_cast %22 : vector<128x1xi1> to vector<128x1xi1>
    %24 = vector.broadcast %23 : vector<128x1xi1> to vector<128x128xi1>
    %25 = vector.broadcast %cst_9 : f32 to vector<128x128xf32>
    %26 = arith.select %24, %25, %18 : vector<128x128xi1>, vector<128x128xf32>
    %c0_i32_10 = arith.constant 0 : i32
    %27 = vector.broadcast %c0_i32_10 : i32 to vector<128x1xi32>
    %28 = arith.cmpi eq, %15, %27 : vector<128x1xi32>
    %cst_11 = arith.constant 0.000000e+00 : f32
    %29 = vector.shape_cast %28 : vector<128x1xi1> to vector<128x1xi1>
    %30 = vector.broadcast %29 : vector<128x1xi1> to vector<128x128xi1>
    %31 = vector.broadcast %cst_11 : f32 to vector<128x128xf32>
    %32 = arith.select %30, %31, %20 : vector<128x128xi1>, vector<128x128xf32>
    %c2_i32 = arith.constant 2 : i32
    %33 = vector.broadcast %c2_i32 : i32 to vector<128x1xi32>
    %34 = arith.cmpi slt, %14, %33 : vector<128x1xi32>
    %c4_i32 = arith.constant 4 : i32
    %35 = vector.broadcast %c4_i32 : i32 to vector<128x1xi32>
    %36 = arith.cmpi slt, %14, %35 : vector<128x1xi32>
    %37 = vector.shape_cast %36 : vector<128x1xi1> to vector<128x1xi1>
    %38 = vector.broadcast %37 : vector<128x1xi1> to vector<128x128xi1>
    %39 = arith.select %38, %32, %0 : vector<128x128xi1>, vector<128x128xf32>
    %40 = vector.shape_cast %34 : vector<128x1xi1> to vector<128x1xi1>
    %41 = vector.broadcast %40 : vector<128x1xi1> to vector<128x128xi1>
    %42 = arith.select %41, %26, %39 : vector<128x128xi1>, vector<128x128xf32>
    %c0_12 = arith.constant 0 : index
    %c0_13 = arith.constant 0 : index
    %43 = vector.load %arg4[%c0_12, %c0_13] : memref<128x128xf32, #tpu.memory_space<vmem>>, vector<128x128xf32>
    tpu.vector_store %arg4[%c0_12, %c0_13], %42 {strides = array<i32>} : memref<128x128xf32, #tpu.memory_space<vmem>>, vector<128x128xf32>,
    return
  }
  func.func @transform_0(%arg0: i32) -> (i32, i32) {
    %c0_i32 = arith.constant 0 : i32
    %c0_i32_0 = arith.constant 0 : i32
    return %arg0, %c0_i32 : i32, i32
  }
  func.func @transform_1(%arg0: i32) -> (i32, i32) {
    %c0_i32 = arith.constant 0 : i32
    %c0_i32_0 = arith.constant 0 : i32
    %c0_i32_1 = arith.constant 0 : i32
    return %c0_i32, %c0_i32_0 : i32, i32
  }
  func.func @transform_2(%arg0: i32) -> (i32, i32) {
    %c0_i32 = arith.constant 0 : i32
    %c0_i32_0 = arith.constant 0 : i32
    %c0_i32_1 = arith.constant 0 : i32
    return %c0_i32, %c0_i32_0 : i32, i32
  }
  func.func @transform_3(%arg0: i32) -> (i32, i32) {
    %c0_i32 = arith.constant 0 : i32
    %c0_i32_0 = arith.constant 0 : i32
    return %arg0, %c0_i32 : i32, i32
  }
}

</mosaic_0001>

<llo_original>
// kernel: tpu_custom_call.1
$region0: #{tpu_custom_call.1}
  #allocation0 [shape = 'u32[]', space=smem, size = 0x4, offset = 0x4, fixed_abs, tag = 'smem constant byte address 0x4 - core index']
  #allocation1 [shape = 'u32[144,128]{1,0:T(1,128)}', space=vmem, size = 0x12000, scoped, tag = 'internal scratch']
  %s0 = inlined_call_operand.vmem [shape: f32[256,128], index: 0, kind: input, shape index: {}]
  %s1 = inlined_call_operand.vmem [shape: s32[128,1], index: 1, kind: input, shape index: {}]
  %s2 = inlined_call_operand.vmem [shape: s32[128,1], index: 2, kind: input, shape index: {}]
  %s3 = inlined_call_operand.hbm [shape: f32[256,128], index: 3, kind: output, shape index: {}]
  %s4 = sld [smem:[#allocation0]]
  $region45: #{tpu_custom_call.1} parent=0
    _
  %s6 = ssub.s32 1, %s4
  %s7 = scalar_select 0, %s6, %s4
  $region1: #{tpu_custom_call.1} parent=0
    #allocation2 [shape = 'u8[131072]{0}', space=vmem, size = 0x20000, scoped, tag = 'output window, operand 0']
    #allocation3 [shape = 's32[2]{0}', space=sflag, size = 0x8, scoped, tag = 'scoped memory for tpu_custom_call.1']
    %8 = vsyncpa [#allocation3], 0
    %s9 = scalar_lea.sflag [#allocation3], 1
    %10 = vsyncpa %s9, 0
    loop: start=0, step=1, limit=4
    $region2: #{tpu_custom_call.1} parent=1 // loop_pre_header
      _
    $region3: #{tpu_custom_call.1} parent=1 // loop_header
      %s12 = sphi 0, %s16
      %p13 = scmp.ge.s32.totalorder %s12, 4
      %s22 = sphi 0, %s24
      %s25 = sphi 0, %s22
      %s26 = sphi 0, %s25
      %s42 = sphi 0, %s26
      %s46 = sphi 0, %s46
      %s48 = sphi 0, %s46
      %s49 = sphi 0, %s48
      %s63 = sphi 0, %s49
      %s67 = sphi 0, %s67
      %s69 = sphi 0, %s67
      %s70 = sphi 0, %s69
      %s84 = sphi 0, %s70
      %s90 = sphi 0, %s92
      %s93 = sphi 0, %s90
      %s94 = sphi 0, %s93
      %s110 = sphi 0, %s94
    $region4: #{tpu_custom_call.1} parent=1 // loop_header_branch
      %15 = sbr.rel (%p13) target = $region8
    $region5: #{tpu_custom_call.1} parent=1 // loop_body
      %s17 = ssub.s32 %s12, 1
      %s18 = ssub.s32 %s12, 2
      %s19 = sadd.s32 %s12, 1
      %s20 = ssub.s32 %s12, %s19
      %p21 = scmp.eq.s32.totalorder %s20, 0
      %s23 = sadd.s32 %s22, 1
      %s24 = scalar_select %p21, %s22, %s23
      %p27 = pneg %p21
      %p28 = scmp.eq.s32.totalorder %s12, 1
      %p29 = por %p27, %p28
      %p30 = scmp.ne.s32.totalorder %s22, %s25
      %p31 = scmp.eq.s32.totalorder %s12, 0
      %p32 = por %p30, %p31
      %p33 = scmp.ne.s32.totalorder %s22, %s25
      %p34 = scmp.eq.s32.totalorder %s17, 1
      %p35 = por %p33, %p34
      %p36 = scmp.ne.s32.totalorder %s25, %s26
      %p37 = scmp.eq.s32.totalorder %s17, 0
      %p38 = por %p36, %p37
      %p39 = scmp.ne.s32.totalorder %s25, %s26
      %p40 = scmp.eq.s32.totalorder %s18, 1
      %p41 = por %p39, %p40
      %p43 = scmp.ne.s32.totalorder %s26, %s42
      %p44 = scmp.eq.s32.totalorder %s18, 0
      %p45 = por %p43, %p44
      %s47 = sadd.s32 %s46, 1
      %p50 = scmp.eq.s32.totalorder %s12, 1
      %p51 = scmp.ne.s32.totalorder %s46, %s48
      %p52 = scmp.eq.s32.totalorder %s12, 0
      %p53 = por %p51, %p52
      %p54 = scmp.ne.s32.totalorder %s46, %s48
      %p55 = scmp.eq.s32.totalorder %s17, 1
      %p56 = por %p54, %p55
      %p57 = scmp.ne.s32.totalorder %s48, %s49
      %p58 = scmp.eq.s32.totalorder %s17, 0
      %p59 = por %p57, %p58
      %p60 = scmp.ne.s32.totalorder %s48, %s49
      %p61 = scmp.eq.s32.totalorder %s18, 1
      %p62 = por %p60, %p61
      %p64 = scmp.ne.s32.totalorder %s49, %s63
      %p65 = scmp.eq.s32.totalorder %s18, 0
      %p66 = por %p64, %p65
      %s68 = sadd.s32 %s67, 1
      %p71 = scmp.eq.s32.totalorder %s12, 1
      %p72 = scmp.ne.s32.totalorder %s67, %s69
      %p73 = scmp.eq.s32.totalorder %s12, 0
      %p74 = por %p72, %p73
      %p75 = scmp.ne.s32.totalorder %s67, %s69
      %p76 = scmp.eq.s32.totalorder %s17, 1
      %p77 = por %p75, %p76
      %p78 = scmp.ne.s32.totalorder %s69, %s70
      %p79 = scmp.eq.s32.totalorder %s17, 0
      %p80 = por %p78, %p79
      %p81 = scmp.ne.s32.totalorder %s69, %s70
      %p82 = scmp.eq.s32.totalorder %s18, 1
      %p83 = por %p81, %p82
      %p85 = scmp.ne.s32.totalorder %s70, %s84
      %p86 = scmp.eq.s32.totalorder %s18, 0
      %p87 = por %p85, %p86
      %s88 = ssub.s32 %s12, %s19
      %p89 = scmp.eq.s32.totalorder %s88, 0
      %s91 = sadd.s32 %s90, 1
      %s92 = scalar_select %p89, %s90, %s91
      %p95 = pneg %p89
      %p96 = scmp.eq.s32.totalorder %s12, 1
      %p97 = por %p95, %p96
      %p98 = scmp.ne.s32.totalorder %s90, %s93
      %p99 = scmp.eq.s32.totalorder %s12, 0
      %p100 = por %p98, %p99
      %p101 = scmp.ne.s32.totalorder %s90, %s93
      %p102 = scmp.eq.s32.totalorder %s17, 1
      %p103 = por %p101, %p102
      %p104 = scmp.ne.s32.totalorder %s93, %s94
      %p105 = scmp.eq.s32.totalorder %s17, 0
      %p106 = por %p104, %p105
      %p107 = scmp.ne.s32.totalorder %s93, %s94
      %p108 = scmp.eq.s32.totalorder %s18, 1
      %p109 = por %p107, %p108
      %p111 = scmp.ne.s32.totalorder %s94, %s110
      %p112 = scmp.eq.s32.totalorder %s18, 0
      %p113 = por %p111, %p112
      %p114 = scmp.le.s32.totalorder 1, %s12
      %p115 = scmp.lt.s32.totalorder %s12, 3
      %p116 = pnand %p114, %p115
      %p117 = pneg %p116
      // Predicated region
      $region9: #{tpu_custom_call.1} parent=5 // pred_check
        _
      $region10: #{tpu_custom_call.1} parent=5 // pred_check_branch
        %119 = sbr.rel (%p116) target = $region12
      $region11: #{tpu_custom_call.1} parent=5 // pred_region
        %s120 = ssub.s32 %s12, 1
        // Predicated region
        $region13: #{tpu_custom_call.1} parent=11 // pred_check
          %p121 = pneg %p59
        $region14: #{tpu_custom_call.1} parent=11 // pred_check_branch
          %123 = sbr.rel (%p121) target = $region16
        $region15: #{tpu_custom_call.1} parent=11 // pred_region
          _
        $region16: #{tpu_custom_call.1} parent=11 // pred_fallthru
          _
        // Predicated region
        $region17: #{tpu_custom_call.1} parent=11 // pred_check
          %p124 = pneg %p80
        $region18: #{tpu_custom_call.1} parent=11 // pred_check_branch
          %126 = sbr.rel (%p124) target = $region20
        $region19: #{tpu_custom_call.1} parent=11 // pred_region
          _
        $region20: #{tpu_custom_call.1} parent=11 // pred_fallthru
          _
      $region12: #{tpu_custom_call.1} parent=5 // pred_fallthru
        _
      %p127 = scmp.lt.s32.totalorder %s12, 2
      // Predicated region
      $region21: #{tpu_custom_call.1} parent=5 // pred_check
        %p128 = pneg %p127
      $region22: #{tpu_custom_call.1} parent=5 // pred_check_branch
        %130 = sbr.rel (%p128) target = $region24
      $region23: #{tpu_custom_call.1} parent=5 // pred_region
        // Predicated region
        $region25: #{tpu_custom_call.1} parent=23 // pred_check
          %p131 = pneg %p32
        $region26: #{tpu_custom_call.1} parent=23 // pred_check_branch
          %133 = sbr.rel (%p131) target = $region28
        $region27: #{tpu_custom_call.1} parent=23 // pred_region
          %s134 = smul.u32 16, %s12
          %p135 = scmp.lt.s32.totalorder %s134, 31
          %s136 = scalar_select %p135, %s134, 31
          %s137 = smul.addr %s136, 8
          %s138 = scalar_lea.vmem %s0, %s137
          %s139 = smul.u32 16, %s12
        $region28: #{tpu_custom_call.1} parent=23 // pred_fallthru
          _
      $region24: #{tpu_custom_call.1} parent=5 // pred_fallthru
        _
      %p140 = scmp.le.s32.totalorder 1, %s12
      %p141 = scmp.lt.s32.totalorder %s12, 3
      %p142 = pnand %p140, %p141
      %p143 = pneg %p142
      // Predicated region
      $region29: #{tpu_custom_call.1} parent=5 // pred_check
        _
      $region30: #{tpu_custom_call.1} parent=5 // pred_check_branch
        %145 = sbr.rel (%p142) target = $region32
      $region31: #{tpu_custom_call.1} parent=5 // pred_region
        %s146 = ssub.s32 %s12, 1
        %s147 = smul.u32 16, %s17
        %p148 = scmp.lt.s32.totalorder %s147, 31
        %s149 = scalar_select %p148, %s147, 31
        %s150 = smul.addr %s149, 8
        %s151 = scalar_lea.vmem %s0, %s150
        %p152 = pneg %p38
        %p153 = pneg %p35
        %p154 = pneg %p59
        %p155 = pneg %p56
        %p156 = pneg %p80
        %p157 = pneg %p77
        %p158 = pneg %p106
        %p159 = pneg %p103
        %s160 = sand.u32 %s93, 1
        %s161 = scalar_lea.sflag [#allocation3], %s160
        %s162 = sand.u32 %s93, 1
        %s163 = smul.addr %s162, 128
        %s164 = scalar_lea.vmem [#allocation2], %s163
        %s165 = smul.u32 16, %s17
        %p166 = scmp.lt.s32.totalorder %s165, 31
        %s167 = scalar_select %p166, %s165, 31
        %s168 = smul.addr %s167, 8
        %s169 = scalar_lea.vmem %s0, %s168
        %s170 = smul.u32 16, %s17
        %s171 = smul.u32 16, %s17
        %v172 = vld [vmem:[%s169] sm:$0xff]
        %v173 = vld [vmem:[%s169 + $0x8] sm:$0xff]
        %v174 = vld [vmem:[%s169 + $0x10] sm:$0xff]
        %v175 = vld [vmem:[%s169 + $0x18] sm:$0xff]
        %v176 = vld [vmem:[%s169 + $0x20] sm:$0xff]
        %v177 = vld [vmem:[%s169 + $0x28] sm:$0xff]
        %v178 = vld [vmem:[%s169 + $0x30] sm:$0xff]
        %v179 = vld [vmem:[%s169 + $0x38] sm:$0xff]
        %v180 = vld [vmem:[%s169 + $0x40] sm:$0xff]
        %v181 = vld [vmem:[%s169 + $0x48] sm:$0xff]
        %v182 = vld [vmem:[%s169 + $0x50] sm:$0xff]
        %v183 = vld [vmem:[%s169 + $0x58] sm:$0xff]
        %v184 = vld [vmem:[%s169 + $0x60] sm:$0xff]
        %v185 = vld [vmem:[%s169 + $0x68] sm:$0xff]
        %v186 = vld [vmem:[%s169 + $0x70] sm:$0xff]
        %v187 = vld [vmem:[%s169 + $0x78] sm:$0xff]
        %v188 = vld [vmem:[%s2] sm:$0xff]
        %v189 = vld [vmem:[%s2 + $0x8] sm:$0xff]
        %v190 = vld [vmem:[%s2 + $0x10] sm:$0xff]
        %v191 = vld [vmem:[%s2 + $0x18] sm:$0xff]
        %v192 = vld [vmem:[%s2 + $0x20] sm:$0xff]
        %v193 = vld [vmem:[%s2 + $0x28] sm:$0xff]
        %v194 = vld [vmem:[%s2 + $0x30] sm:$0xff]
        %v195 = vld [vmem:[%s2 + $0x38] sm:$0xff]
        %v196 = vld [vmem:[%s2 + $0x40] sm:$0xff]
        %v197 = vld [vmem:[%s2 + $0x48] sm:$0xff]
        %v198 = vld [vmem:[%s2 + $0x50] sm:$0xff]
        %v199 = vld [vmem:[%s2 + $0x58] sm:$0xff]
        %v200 = vld [vmem:[%s2 + $0x60] sm:$0xff]
        %v201 = vld [vmem:[%s2 + $0x68] sm:$0xff]
        %v202 = vld [vmem:[%s2 + $0x70] sm:$0xff]
        %v203 = vld [vmem:[%s2 + $0x78] sm:$0xff]
        %v204 = vld [vmem:[%s1] sm:$0xff]
        %v205 = vld [vmem:[%s1 + $0x8] sm:$0xff]
        %v206 = vld [vmem:[%s1 + $0x10] sm:$0xff]
        %v207 = vld [vmem:[%s1 + $0x18] sm:$0xff]
        %v208 = vld [vmem:[%s1 + $0x20] sm:$0xff]
        %v209 = vld [vmem:[%s1 + $0x28] sm:$0xff]
        %v210 = vld [vmem:[%s1 + $0x30] sm:$0xff]
        %v211 = vld [vmem:[%s1 + $0x38] sm:$0xff]
        %v212 = vld [vmem:[%s1 + $0x40] sm:$0xff]
        %v213 = vld [vmem:[%s1 + $0x48] sm:$0xff]
        %v214 = vld [vmem:[%s1 + $0x50] sm:$0xff]
        %v215 = vld [vmem:[%s1 + $0x58] sm:$0xff]
        %v216 = vld [vmem:[%s1 + $0x60] sm:$0xff]
        %v217 = vld [vmem:[%s1 + $0x68] sm:$0xff]
        %v218 = vld [vmem:[%s1 + $0x70] sm:$0xff]
        %v219 = vld [vmem:[%s1 + $0x78] sm:$0xff]
        %vm236 = vcmask 1046528
        %v237 = vrot.slane %v172, 1
        %v238 = vrot.slane %v173, 1
        %v239 = vsel %vm236, %v237, %v238
        %v240 = vrot.slane %v174, 1
        %v241 = vsel %vm236, %v238, %v240
        %v242 = vrot.slane %v175, 1
        %v243 = vsel %vm236, %v240, %v242
        %v244 = vrot.slane %v176, 1
        %v245 = vsel %vm236, %v242, %v244
        %v246 = vrot.slane %v177, 1
        %v247 = vsel %vm236, %v244, %v246
        %v248 = vrot.slane %v178, 1
        %v249 = vsel %vm236, %v246, %v248
        %v250 = vrot.slane %v179, 1
        %v251 = vsel %vm236, %v248, %v250
        %v252 = vrot.slane %v180, 1
        %v253 = vsel %vm236, %v250, %v252
        %v254 = vrot.slane %v181, 1
        %v255 = vsel %vm236, %v252, %v254
        %v256 = vrot.slane %v182, 1
        %v257 = vsel %vm236, %v254, %v256
        %v258 = vrot.slane %v183, 1
        %v259 = vsel %vm236, %v256, %v258
        %v260 = vrot.slane %v184, 1
        %v261 = vsel %vm236, %v258, %v260
        %v262 = vrot.slane %v185, 1
        %v263 = vsel %vm236, %v260, %v262
        %v264 = vrot.slane %v186, 1
        %v265 = vsel %vm236, %v262, %v264
        %v266 = vrot.slane %v187, 1
        %v267 = vsel %vm236, %v264, %v266
        %v284 = vsel %vm236, %v266, 0.0
        %vm285 = vcmask 1040384
        %v286 = vrot.slane %v172, 7
        %v287 = vrot.slane %v173, 7
        %v288 = vsel %vm285, %v286, %v287
        %v289 = vrot.slane %v174, 7
        %v290 = vsel %vm285, %v287, %v289
        %v291 = vrot.slane %v175, 7
        %v292 = vsel %vm285, %v289, %v291
        %v293 = vrot.slane %v176, 7
        %v294 = vsel %vm285, %v291, %v293
        %v295 = vrot.slane %v177, 7
        %v296 = vsel %vm285, %v293, %v295
        %v297 = vrot.slane %v178, 7
        %v298 = vsel %vm285, %v295, %v297
        %v299 = vrot.slane %v179, 7
        %v300 = vsel %vm285, %v297, %v299
        %v301 = vrot.slane %v180, 7
        %v302 = vsel %vm285, %v299, %v301
        %v303 = vrot.slane %v181, 7
        %v304 = vsel %vm285, %v301, %v303
        %v305 = vrot.slane %v182, 7
        %v306 = vsel %vm285, %v303, %v305
        %v307 = vrot.slane %v183, 7
        %v308 = vsel %vm285, %v305, %v307
        %v309 = vrot.slane %v184, 7
        %v310 = vsel %vm285, %v307, %v309
        %v311 = vrot.slane %v185, 7
        %v312 = vsel %vm285, %v309, %v311
        %v313 = vrot.slane %v186, 7
        %v314 = vsel %vm285, %v311, %v313
        %v315 = vrot.slane %v187, 7
        %v316 = vsel %vm285, %v313, %v315
        %v333 = vsel %vm285, 0.0, %v286
        %vm334 = vcmp.eq.s32.totalorder %v204, 7
        %vm335 = vcmp.eq.s32.totalorder %v205, 7
        %vm336 = vcmp.eq.s32.totalorder %v206, 7
        %vm337 = vcmp.eq.s32.totalorder %v207, 7
        %vm338 = vcmp.eq.s32.totalorder %v208, 7
        %vm339 = vcmp.eq.s32.totalorder %v209, 7
        %vm340 = vcmp.eq.s32.totalorder %v210, 7
        %vm341 = vcmp.eq.s32.totalorder %v211, 7
        %vm342 = vcmp.eq.s32.totalorder %v212, 7
        %vm343 = vcmp.eq.s32.totalorder %v213, 7
        %vm344 = vcmp.eq.s32.totalorder %v214, 7
        %vm345 = vcmp.eq.s32.totalorder %v215, 7
        %vm346 = vcmp.eq.s32.totalorder %v216, 7
        %vm347 = vcmp.eq.s32.totalorder %v217, 7
        %vm348 = vcmp.eq.s32.totalorder %v218, 7
        %vm349 = vcmp.eq.s32.totalorder %v219, 7
        %v350 = vsel %vm334, 1, 0
        %v351 = vsel %vm335, 1, 0
        %v352 = vsel %vm336, 1, 0
        %v353 = vsel %vm337, 1, 0
        %v354 = vsel %vm338, 1, 0
        %v355 = vsel %vm339, 1, 0
        %v356 = vsel %vm340, 1, 0
        %v357 = vsel %vm341, 1, 0
        %v358 = vsel %vm342, 1, 0
        %v359 = vsel %vm343, 1, 0
        %v360 = vsel %vm344, 1, 0
        %v361 = vsel %vm345, 1, 0
        %v362 = vsel %vm346, 1, 0
        %v363 = vsel %vm347, 1, 0
        %v364 = vsel %vm348, 1, 0
        %v365 = vsel %vm349, 1, 0
        %366 = vset.pattern.permute.xlu0 0
        %367 = vperm.xlu0 %366, %v350
        %v368 = vpop.permute.xlu0 %367
        %369 = vset.pattern.permute.xlu0 0
        %370 = vperm.xlu0 %369, %v351
        %v371 = vpop.permute.xlu0 %370
        %372 = vset.pattern.permute.xlu0 0
        %373 = vperm.xlu0 %372, %v352
        %v374 = vpop.permute.xlu0 %373
        %375 = vset.pattern.permute.xlu0 0
        %376 = vperm.xlu0 %375, %v353
        %v377 = vpop.permute.xlu0 %376
        %378 = vset.pattern.permute.xlu0 0
        %379 = vperm.xlu0 %378, %v354
        %v380 = vpop.permute.xlu0 %379
        %381 = vset.pattern.permute.xlu0 0
        %382 = vperm.xlu0 %381, %v355
        %v383 = vpop.permute.xlu0 %382
        %384 = vset.pattern.permute.xlu0 0
        %385 = vperm.xlu0 %384, %v356
        %v386 = vpop.permute.xlu0 %385
        %387 = vset.pattern.permute.xlu0 0
        %388 = vperm.xlu0 %387, %v357
        %v389 = vpop.permute.xlu0 %388
        %390 = vset.pattern.permute.xlu0 0
        %391 = vperm.xlu0 %390, %v358
        %v392 = vpop.permute.xlu0 %391
        %393 = vset.pattern.permute.xlu0 0
        %394 = vperm.xlu0 %393, %v359
        %v395 = vpop.permute.xlu0 %394
        %396 = vset.pattern.permute.xlu0 0
        %397 = vperm.xlu0 %396, %v360
        %v398 = vpop.permute.xlu0 %397
        %399 = vset.pattern.permute.xlu0 0
        %400 = vperm.xlu0 %399, %v361
        %v401 = vpop.permute.xlu0 %400
        %402 = vset.pattern.permute.xlu0 0
        %403 = vperm.xlu0 %402, %v362
        %v404 = vpop.permute.xlu0 %403
        %405 = vset.pattern.permute.xlu0 0
        %406 = vperm.xlu0 %405, %v363
        %v407 = vpop.permute.xlu0 %406
        %408 = vset.pattern.permute.xlu0 0
        %409 = vperm.xlu0 %408, %v364
        %v410 = vpop.permute.xlu0 %409
        %411 = vset.pattern.permute.xlu0 0
        %412 = vperm.xlu0 %411, %v365
        %v413 = vpop.permute.xlu0 %412
        %vm414 = vcmp.eq.s32.totalorder %v368, 1
        %vm415 = vcmp.eq.s32.totalorder %v371, 1
        %vm416 = vcmp.eq.s32.totalorder %v374, 1
        %vm417 = vcmp.eq.s32.totalorder %v377, 1
        %vm418 = vcmp.eq.s32.totalorder %v380, 1
        %vm419 = vcmp.eq.s32.totalorder %v383, 1
        %vm420 = vcmp.eq.s32.totalorder %v386, 1
        %vm421 = vcmp.eq.s32.totalorder %v389, 1
        %vm422 = vcmp.eq.s32.totalorder %v392, 1
        %vm423 = vcmp.eq.s32.totalorder %v395, 1
        %vm424 = vcmp.eq.s32.totalorder %v398, 1
        %vm425 = vcmp.eq.s32.totalorder %v401, 1
        %vm426 = vcmp.eq.s32.totalorder %v404, 1
        %vm427 = vcmp.eq.s32.totalorder %v407, 1
        %vm428 = vcmp.eq.s32.totalorder %v410, 1
        %vm429 = vcmp.eq.s32.totalorder %v413, 1
        %v430 = vsel %vm414, 0.0, %v239
        %v431 = vsel %vm415, 0.0, %v241
        %v432 = vsel %vm416, 0.0, %v243
        %v433 = vsel %vm417, 0.0, %v245
        %v434 = vsel %vm418, 0.0, %v247
        %v435 = vsel %vm419, 0.0, %v249
        %v436 = vsel %vm420, 0.0, %v251
        %v437 = vsel %vm421, 0.0, %v253
        %v438 = vsel %vm422, 0.0, %v255
        %v439 = vsel %vm423, 0.0, %v257
        %v440 = vsel %vm424, 0.0, %v259
        %v441 = vsel %vm425, 0.0, %v261
        %v442 = vsel %vm426, 0.0, %v263
        %v443 = vsel %vm427, 0.0, %v265
        %v444 = vsel %vm428, 0.0, %v267
        %v445 = vsel %vm429, 0.0, %v284
        %vm446 = vcmp.eq.s32.totalorder %v204, 0
        %vm447 = vcmp.eq.s32.totalorder %v205, 0
        %vm448 = vcmp.eq.s32.totalorder %v206, 0
        %vm449 = vcmp.eq.s32.totalorder %v207, 0
        %vm450 = vcmp.eq.s32.totalorder %v208, 0
        %vm451 = vcmp.eq.s32.totalorder %v209, 0
        %vm452 = vcmp.eq.s32.totalorder %v210, 0
        %vm453 = vcmp.eq.s32.totalorder %v211, 0
        %vm454 = vcmp.eq.s32.totalorder %v212, 0
        %vm455 = vcmp.eq.s32.totalorder %v213, 0
        %vm456 = vcmp.eq.s32.totalorder %v214, 0
        %vm457 = vcmp.eq.s32.totalorder %v215, 0
        %vm458 = vcmp.eq.s32.totalorder %v216, 0
        %vm459 = vcmp.eq.s32.totalorder %v217, 0
        %vm460 = vcmp.eq.s32.totalorder %v218, 0
        %vm461 = vcmp.eq.s32.totalorder %v219, 0
        %v462 = vsel %vm446, 1, 0
        %v463 = vsel %vm447, 1, 0
        %v464 = vsel %vm448, 1, 0
        %v465 = vsel %vm449, 1, 0
        %v466 = vsel %vm450, 1, 0
        %v467 = vsel %vm451, 1, 0
        %v468 = vsel %vm452, 1, 0
        %v469 = vsel %vm453, 1, 0
        %v470 = vsel %vm454, 1, 0
        %v471 = vsel %vm455, 1, 0
        %v472 = vsel %vm456, 1, 0
        %v473 = vsel %vm457, 1, 0
        %v474 = vsel %vm458, 1, 0
        %v475 = vsel %vm459, 1, 0
        %v476 = vsel %vm460, 1, 0
        %v477 = vsel %vm461, 1, 0
        %478 = vset.pattern.permute.xlu0 0
        %479 = vperm.xlu0 %478, %v462
        %v480 = vpop.permute.xlu0 %479
        %481 = vset.pattern.permute.xlu0 0
        %482 = vperm.xlu0 %481, %v463
        %v483 = vpop.permute.xlu0 %482
        %484 = vset.pattern.permute.xlu0 0
        %485 = vperm.xlu0 %484, %v464
        %v486 = vpop.permute.xlu0 %485
        %487 = vset.pattern.permute.xlu0 0
        %488 = vperm.xlu0 %487, %v465
        %v489 = vpop.permute.xlu0 %488
        %490 = vset.pattern.permute.xlu0 0
        %491 = vperm.xlu0 %490, %v466
        %v492 = vpop.permute.xlu0 %491
        %493 = vset.pattern.permute.xlu0 0
        %494 = vperm.xlu0 %493, %v467
        %v495 = vpop.permute.xlu0 %494
        %496 = vset.pattern.permute.xlu0 0
        %497 = vperm.xlu0 %496, %v468
        %v498 = vpop.permute.xlu0 %497
        %499 = vset.pattern.permute.xlu0 0
        %500 = vperm.xlu0 %499, %v469
        %v501 = vpop.permute.xlu0 %500
        %502 = vset.pattern.permute.xlu0 0
        %503 = vperm.xlu0 %502, %v470
        %v504 = vpop.permute.xlu0 %503
        %505 = vset.pattern.permute.xlu0 0
        %506 = vperm.xlu0 %505, %v471
        %v507 = vpop.permute.xlu0 %506
        %508 = vset.pattern.permute.xlu0 0
        %509 = vperm.xlu0 %508, %v472
        %v510 = vpop.permute.xlu0 %509
        %511 = vset.pattern.permute.xlu0 0
        %512 = vperm.xlu0 %511, %v473
        %v513 = vpop.permute.xlu0 %512
        %514 = vset.pattern.permute.xlu0 0
        %515 = vperm.xlu0 %514, %v474
        %v516 = vpop.permute.xlu0 %515
        %517 = vset.pattern.permute.xlu0 0
        %518 = vperm.xlu0 %517, %v475
        %v519 = vpop.permute.xlu0 %518
        %520 = vset.pattern.permute.xlu0 0
        %521 = vperm.xlu0 %520, %v476
        %v522 = vpop.permute.xlu0 %521
        %523 = vset.pattern.permute.xlu0 0
        %524 = vperm.xlu0 %523, %v477
        %v525 = vpop.permute.xlu0 %524
        %vm526 = vcmp.eq.s32.totalorder %v480, 1
        %vm527 = vcmp.eq.s32.totalorder %v483, 1
        %vm528 = vcmp.eq.s32.totalorder %v486, 1
        %vm529 = vcmp.eq.s32.totalorder %v489, 1
        %vm530 = vcmp.eq.s32.totalorder %v492, 1
        %vm531 = vcmp.eq.s32.totalorder %v495, 1
        %vm532 = vcmp.eq.s32.totalorder %v498, 1
        %vm533 = vcmp.eq.s32.totalorder %v501, 1
        %vm534 = vcmp.eq.s32.totalorder %v504, 1
        %vm535 = vcmp.eq.s32.totalorder %v507, 1
        %vm536 = vcmp.eq.s32.totalorder %v510, 1
        %vm537 = vcmp.eq.s32.totalorder %v513, 1
        %vm538 = vcmp.eq.s32.totalorder %v516, 1
        %vm539 = vcmp.eq.s32.totalorder %v519, 1
        %vm540 = vcmp.eq.s32.totalorder %v522, 1
        %vm541 = vcmp.eq.s32.totalorder %v525, 1
        %v542 = vsel %vm526, 0.0, %v333
        %v543 = vsel %vm527, 0.0, %v288
        %v544 = vsel %vm528, 0.0, %v290
        %v545 = vsel %vm529, 0.0, %v292
        %v546 = vsel %vm530, 0.0, %v294
        %v547 = vsel %vm531, 0.0, %v296
        %v548 = vsel %vm532, 0.0, %v298
        %v549 = vsel %vm533, 0.0, %v300
        %v550 = vsel %vm534, 0.0, %v302
        %v551 = vsel %vm535, 0.0, %v304
        %v552 = vsel %vm536, 0.0, %v306
        %v553 = vsel %vm537, 0.0, %v308
        %v554 = vsel %vm538, 0.0, %v310
        %v555 = vsel %vm539, 0.0, %v312
        %v556 = vsel %vm540, 0.0, %v314
        %v557 = vsel %vm541, 0.0, %v316
        %vm558 = vcmp.lt.s32.totalorder %v188, 2
        %vm559 = vcmp.lt.s32.totalorder %v189, 2
        %vm560 = vcmp.lt.s32.totalorder %v190, 2
        %vm561 = vcmp.lt.s32.totalorder %v191, 2
        %vm562 = vcmp.lt.s32.totalorder %v192, 2
        %vm563 = vcmp.lt.s32.totalorder %v193, 2
        %vm564 = vcmp.lt.s32.totalorder %v194, 2
        %vm565 = vcmp.lt.s32.totalorder %v195, 2
        %vm566 = vcmp.lt.s32.totalorder %v196, 2
        %vm567 = vcmp.lt.s32.totalorder %v197, 2
        %vm568 = vcmp.lt.s32.totalorder %v198, 2
        %vm569 = vcmp.lt.s32.totalorder %v199, 2
        %vm570 = vcmp.lt.s32.totalorder %v200, 2
        %vm571 = vcmp.lt.s32.totalorder %v201, 2
        %vm572 = vcmp.lt.s32.totalorder %v202, 2
        %vm573 = vcmp.lt.s32.totalorder %v203, 2
        %vm574 = vcmp.lt.s32.totalorder %v188, 4
        %vm575 = vcmp.lt.s32.totalorder %v189, 4
        %vm576 = vcmp.lt.s32.totalorder %v190, 4
        %vm577 = vcmp.lt.s32.totalorder %v191, 4
        %vm578 = vcmp.lt.s32.totalorder %v192, 4
        %vm579 = vcmp.lt.s32.totalorder %v193, 4
        %vm580 = vcmp.lt.s32.totalorder %v194, 4
        %vm581 = vcmp.lt.s32.totalorder %v195, 4
        %vm582 = vcmp.lt.s32.totalorder %v196, 4
        %vm583 = vcmp.lt.s32.totalorder %v197, 4
        %vm584 = vcmp.lt.s32.totalorder %v198, 4
        %vm585 = vcmp.lt.s32.totalorder %v199, 4
        %vm586 = vcmp.lt.s32.totalorder %v200, 4
        %vm587 = vcmp.lt.s32.totalorder %v201, 4
        %vm588 = vcmp.lt.s32.totalorder %v202, 4
        %vm589 = vcmp.lt.s32.totalorder %v203, 4
        %v590 = vsel %vm574, 1, 0
        %v591 = vsel %vm575, 1, 0
        %v592 = vsel %vm576, 1, 0
        %v593 = vsel %vm577, 1, 0
        %v594 = vsel %vm578, 1, 0
        %v595 = vsel %vm579, 1, 0
        %v596 = vsel %vm580, 1, 0
        %v597 = vsel %vm581, 1, 0
        %v598 = vsel %vm582, 1, 0
        %v599 = vsel %vm583, 1, 0
        %v600 = vsel %vm584, 1, 0
        %v601 = vsel %vm585, 1, 0
        %v602 = vsel %vm586, 1, 0
        %v603 = vsel %vm587, 1, 0
        %v604 = vsel %vm588, 1, 0
        %v605 = vsel %vm589, 1, 0
        %606 = vset.pattern.permute.xlu0 0
        %607 = vperm.xlu0 %606, %v590
        %v608 = vpop.permute.xlu0 %607
        %609 = vset.pattern.permute.xlu0 0
        %610 = vperm.xlu0 %609, %v591
        %v611 = vpop.permute.xlu0 %610
        %612 = vset.pattern.permute.xlu0 0
        %613 = vperm.xlu0 %612, %v592
        %v614 = vpop.permute.xlu0 %613
        %615 = vset.pattern.permute.xlu0 0
        %616 = vperm.xlu0 %615, %v593
        %v617 = vpop.permute.xlu0 %616
        %618 = vset.pattern.permute.xlu0 0
        %619 = vperm.xlu0 %618, %v594
        %v620 = vpop.permute.xlu0 %619
        %621 = vset.pattern.permute.xlu0 0
        %622 = vperm.xlu0 %621, %v595
        %v623 = vpop.permute.xlu0 %622
        %624 = vset.pattern.permute.xlu0 0
        %625 = vperm.xlu0 %624, %v596
        %v626 = vpop.permute.xlu0 %625
        %627 = vset.pattern.permute.xlu0 0
        %628 = vperm.xlu0 %627, %v597
        %v629 = vpop.permute.xlu0 %628
        %630 = vset.pattern.permute.xlu0 0
        %631 = vperm.xlu0 %630, %v598
        %v632 = vpop.permute.xlu0 %631
        %633 = vset.pattern.permute.xlu0 0
        %634 = vperm.xlu0 %633, %v599
        %v635 = vpop.permute.xlu0 %634
        %636 = vset.pattern.permute.xlu0 0
        %637 = vperm.xlu0 %636, %v600
        %v638 = vpop.permute.xlu0 %637
        %639 = vset.pattern.permute.xlu0 0
        %640 = vperm.xlu0 %639, %v601
        %v641 = vpop.permute.xlu0 %640
        %642 = vset.pattern.permute.xlu0 0
        %643 = vperm.xlu0 %642, %v602
        %v644 = vpop.permute.xlu0 %643
        %645 = vset.pattern.permute.xlu0 0
        %646 = vperm.xlu0 %645, %v603
        %v647 = vpop.permute.xlu0 %646
        %648 = vset.pattern.permute.xlu0 0
        %649 = vperm.xlu0 %648, %v604
        %v650 = vpop.permute.xlu0 %649
        %651 = vset.pattern.permute.xlu0 0
        %652 = vperm.xlu0 %651, %v605
        %v653 = vpop.permute.xlu0 %652
        %vm654 = vcmp.eq.s32.totalorder %v608, 1
        %vm655 = vcmp.eq.s32.totalorder %v611, 1
        %vm656 = vcmp.eq.s32.totalorder %v614, 1
        %vm657 = vcmp.eq.s32.totalorder %v617, 1
        %vm658 = vcmp.eq.s32.totalorder %v620, 1
        %vm659 = vcmp.eq.s32.totalorder %v623, 1
        %vm660 = vcmp.eq.s32.totalorder %v626, 1
        %vm661 = vcmp.eq.s32.totalorder %v629, 1
        %vm662 = vcmp.eq.s32.totalorder %v632, 1
        %vm663 = vcmp.eq.s32.totalorder %v635, 1
        %vm664 = vcmp.eq.s32.totalorder %v638, 1
        %vm665 = vcmp.eq.s32.totalorder %v641, 1
        %vm666 = vcmp.eq.s32.totalorder %v644, 1
        %vm667 = vcmp.eq.s32.totalorder %v647, 1
        %vm668 = vcmp.eq.s32.totalorder %v650, 1
        %vm669 = vcmp.eq.s32.totalorder %v653, 1
        %v670 = vsel %vm654, %v542, %v172
        %v671 = vsel %vm655, %v543, %v173
        %v672 = vsel %vm656, %v544, %v174
        %v673 = vsel %vm657, %v545, %v175
        %v674 = vsel %vm658, %v546, %v176
        %v675 = vsel %vm659, %v547, %v177
        %v676 = vsel %vm660, %v548, %v178
        %v677 = vsel %vm661, %v549, %v179
        %v678 = vsel %vm662, %v550, %v180
        %v679 = vsel %vm663, %v551, %v181
        %v680 = vsel %vm664, %v552, %v182
        %v681 = vsel %vm665, %v553, %v183
        %v682 = vsel %vm666, %v554, %v184
        %v683 = vsel %vm667, %v555, %v185
        %v684 = vsel %vm668, %v556, %v186
        %v685 = vsel %vm669, %v557, %v187
        %v686 = vsel %vm558, 1, 0
        %v687 = vsel %vm559, 1, 0
        %v688 = vsel %vm560, 1, 0
        %v689 = vsel %vm561, 1, 0
        %v690 = vsel %vm562, 1, 0
        %v691 = vsel %vm563, 1, 0
        %v692 = vsel %vm564, 1, 0
        %v693 = vsel %vm565, 1, 0
        %v694 = vsel %vm566, 1, 0
        %v695 = vsel %vm567, 1, 0
        %v696 = vsel %vm568, 1, 0
        %v697 = vsel %vm569, 1, 0
        %v698 = vsel %vm570, 1, 0
        %v699 = vsel %vm571, 1, 0
        %v700 = vsel %vm572, 1, 0
        %v701 = vsel %vm573, 1, 0
        %702 = vset.pattern.permute.xlu0 0
        %703 = vperm.xlu0 %702, %v686
        %v704 = vpop.permute.xlu0 %703
        %705 = vset.pattern.permute.xlu0 0
        %706 = vperm.xlu0 %705, %v687
        %v707 = vpop.permute.xlu0 %706
        %708 = vset.pattern.permute.xlu0 0
        %709 = vperm.xlu0 %708, %v688
        %v710 = vpop.permute.xlu0 %709
        %711 = vset.pattern.permute.xlu0 0
        %712 = vperm.xlu0 %711, %v689
        %v713 = vpop.permute.xlu0 %712
        %714 = vset.pattern.permute.xlu0 0
        %715 = vperm.xlu0 %714, %v690
        %v716 = vpop.permute.xlu0 %715
        %717 = vset.pattern.permute.xlu0 0
        %718 = vperm.xlu0 %717, %v691
        %v719 = vpop.permute.xlu0 %718
        %720 = vset.pattern.permute.xlu0 0
        %721 = vperm.xlu0 %720, %v692
        %v722 = vpop.permute.xlu0 %721
        %723 = vset.pattern.permute.xlu0 0
        %724 = vperm.xlu0 %723, %v693
        %v725 = vpop.permute.xlu0 %724
        %726 = vset.pattern.permute.xlu0 0
        %727 = vperm.xlu0 %726, %v694
        %v728 = vpop.permute.xlu0 %727
        %729 = vset.pattern.permute.xlu0 0
        %730 = vperm.xlu0 %729, %v695
        %v731 = vpop.permute.xlu0 %730
        %732 = vset.pattern.permute.xlu0 0
        %733 = vperm.xlu0 %732, %v696
        %v734 = vpop.permute.xlu0 %733
        %735 = vset.pattern.permute.xlu0 0
        %736 = vperm.xlu0 %735, %v697
        %v737 = vpop.permute.xlu0 %736
        %738 = vset.pattern.permute.xlu0 0
        %739 = vperm.xlu0 %738, %v698
        %v740 = vpop.permute.xlu0 %739
        %741 = vset.pattern.permute.xlu0 0
        %742 = vperm.xlu0 %741, %v699
        %v743 = vpop.permute.xlu0 %742
        %744 = vset.pattern.permute.xlu0 0
        %745 = vperm.xlu0 %744, %v700
        %v746 = vpop.permute.xlu0 %745
        %747 = vset.pattern.permute.xlu0 0
        %748 = vperm.xlu0 %747, %v701
        %v749 = vpop.permute.xlu0 %748
        %vm750 = vcmp.eq.s32.totalorder %v704, 1
        %vm751 = vcmp.eq.s32.totalorder %v707, 1
        %vm752 = vcmp.eq.s32.totalorder %v710, 1
        %vm753 = vcmp.eq.s32.totalorder %v713, 1
        %vm754 = vcmp.eq.s32.totalorder %v716, 1
        %vm755 = vcmp.eq.s32.totalorder %v719, 1
        %vm756 = vcmp.eq.s32.totalorder %v722, 1
        %vm757 = vcmp.eq.s32.totalorder %v725, 1
        %vm758 = vcmp.eq.s32.totalorder %v728, 1
        %vm759 = vcmp.eq.s32.totalorder %v731, 1
        %vm760 = vcmp.eq.s32.totalorder %v734, 1
        %vm761 = vcmp.eq.s32.totalorder %v737, 1
        %vm762 = vcmp.eq.s32.totalorder %v740, 1
        %vm763 = vcmp.eq.s32.totalorder %v743, 1
        %vm764 = vcmp.eq.s32.totalorder %v746, 1
        %vm765 = vcmp.eq.s32.totalorder %v749, 1
        %v766 = vsel %vm750, %v430, %v670
        %v767 = vsel %vm751, %v431, %v671
        %v768 = vsel %vm752, %v432, %v672
        %v769 = vsel %vm753, %v433, %v673
        %v770 = vsel %vm754, %v434, %v674
        %v771 = vsel %vm755, %v435, %v675
        %v772 = vsel %vm756, %v436, %v676
        %v773 = vsel %vm757, %v437, %v677
        %v774 = vsel %vm758, %v438, %v678
        %v775 = vsel %vm759, %v439, %v679
        %v776 = vsel %vm760, %v440, %v680
        %v777 = vsel %vm761, %v441, %v681
        %v778 = vsel %vm762, %v442, %v682
        %v779 = vsel %vm763, %v443, %v683
        %v780 = vsel %vm764, %v444, %v684
        %v781 = vsel %vm765, %v445, %v685
        %782 = vst [vmem:[%s164] sm:$0xff] %v766
        %783 = vst [vmem:[%s164 + $0x8] sm:$0xff] %v767
        %784 = vst [vmem:[%s164 + $0x10] sm:$0xff] %v768
        %785 = vst [vmem:[%s164 + $0x18] sm:$0xff] %v769
        %786 = vst [vmem:[%s164 + $0x20] sm:$0xff] %v770
        %787 = vst [vmem:[%s164 + $0x28] sm:$0xff] %v771
        %788 = vst [vmem:[%s164 + $0x30] sm:$0xff] %v772
        %789 = vst [vmem:[%s164 + $0x38] sm:$0xff] %v773
        %790 = vst [vmem:[%s164 + $0x40] sm:$0xff] %v774
        %791 = vst [vmem:[%s164 + $0x48] sm:$0xff] %v775
        %792 = vst [vmem:[%s164 + $0x50] sm:$0xff] %v776
        %793 = vst [vmem:[%s164 + $0x58] sm:$0xff] %v777
        %794 = vst [vmem:[%s164 + $0x60] sm:$0xff] %v778
        %795 = vst [vmem:[%s164 + $0x68] sm:$0xff] %v779
        %796 = vst [vmem:[%s164 + $0x70] sm:$0xff] %v780
        %797 = vst [vmem:[%s164 + $0x78] sm:$0xff] %v781
        %s798 = sand.u32 %s93, 1
        %s799 = scalar_lea.sflag [#allocation3], %s798
        %s800 = sand.u32 %s93, 1
        %s801 = smul.addr %s800, 128
        %s802 = scalar_lea.vmem [#allocation2], %s801
        // Predicated region
        $region33: #{tpu_custom_call.1} parent=31 // pred_check
          %p803 = pneg %p103
        $region34: #{tpu_custom_call.1} parent=31 // pred_check_branch
          %805 = sbr.rel (%p803) target = $region36
        $region35: #{tpu_custom_call.1} parent=31 // pred_region
          %s806 = smul.u32 16, %s17
          %s808 = ssub.s32 2048, 2048
          %809 = vsyncadd %s799, %s808
          %s810 = smul.addr %s806, 128
          %s811 = scalar_lea.hbm %s3, %s810
          %s812 = sshll.u32 %s802, 4
          %s813 = int_to_ptr.vmem [resolvable:$true] %s812
          %818 = dma.vmem_to_hbm [thread:$0]  %s813, 2048, %s811, %s799, 128, 128, 8
        $region36: #{tpu_custom_call.1} parent=31 // pred_fallthru
          _
      $region32: #{tpu_custom_call.1} parent=5 // pred_fallthru
        _
      %p819 = scmp.le.s32.totalorder 2, %s12
      // Predicated region
      $region37: #{tpu_custom_call.1} parent=5 // pred_check
        %p820 = pneg %p819
      $region38: #{tpu_custom_call.1} parent=5 // pred_check_branch
        %822 = sbr.rel (%p820) target = $region40
      $region39: #{tpu_custom_call.1} parent=5 // pred_region
        %s823 = ssub.s32 %s12, 2
        // Predicated region
        $region41: #{tpu_custom_call.1} parent=39 // pred_check
          %p824 = pneg %p109
        $region42: #{tpu_custom_call.1} parent=39 // pred_check_branch
          %826 = sbr.rel (%p824) target = $region44
        $region43: #{tpu_custom_call.1} parent=39 // pred_region
          %s827 = sand.u32 %s94, 1
          %s828 = scalar_lea.sflag [#allocation3], %s827
          %s829 = sand.u32 %s94, 1
          %s830 = smul.addr %s829, 128
          %s831 = scalar_lea.vmem [#allocation2], %s830
          %832 = dma.done %s828, 2048
        $region44: #{tpu_custom_call.1} parent=39 // pred_fallthru
          _
      $region40: #{tpu_custom_call.1} parent=5 // pred_fallthru
        _
    $region6: #{tpu_custom_call.1} parent=1 // loop_footer
      %s16 = sadd.s32 1, %s12
    $region7: #{tpu_custom_call.1} parent=1 // loop_footer_branch
      %11 = sbr.rel target = $region3
    $region8: #{tpu_custom_call.1} parent=1 // loop_exit
      _
    %833 = vsyncpa [#allocation3], 1
    %s834 = scalar_lea.sflag [#allocation3], 1
    %835 = vsyncpa %s834, 1

</llo_original>
